<compile_context>
chip_gen: v6e
topology: v6e:2x2x1
jax: 0.10.0
libtpu: 0.0.40
codegen_flags: <defaults>
</compile_context>

<pallas_src>
import functools

import jax
import jax.numpy as jnp
from jax.experimental import pallas as pl
from jax.experimental.pallas import tpu as pltpu


def _self_attention_kernel(x_ref, wqkv_ref, bqkv_ref, wp_ref, bp_ref, mask_ref,
                           out_ref, *, n_heads, apply_mask):
    """One batch-block grid step.

    x_ref   : (bs, n_pad, D)   bf16 input block
    wqkv_ref: (D, 3D)          bf16 fused QKV weights (softmax scale folded into Q cols)
    bqkv_ref: (1, 3D)          f32 fused QKV bias (scale folded into Q part)
    wp_ref  : (D, D)           bf16 output-projection weights
    bp_ref  : (1, D)           f32 output-projection bias
    mask_ref: (1, n_pad)       f32 additive key mask (0 valid / -1e30 padded)
    out_ref : (bs, n_pad, D)   f32 output block
    """
    bs, n_pad, dim = x_ref.shape
    hd = dim // n_heads

    # ---- full-width fused QKV projection (dominant FLOPs, full MXU width) ----
    x2 = x_ref[...].reshape(bs * n_pad, dim)                       # bf16
    qkv = jnp.dot(x2, wqkv_ref[...],
                  preferred_element_type=jnp.float32) + bqkv_ref[...]
    qkv = qkv.astype(jnp.bfloat16).reshape(bs, n_pad, 3 * dim)     # (bs, N, 3D)

    if apply_mask:
        add_mask = mask_ref[...].reshape(1, 1, n_pad)              # broadcast over rows

    # ---- per-head attention (static unroll; ~10-15% of FLOPs) ---------------
    head_outs = []
    for h in range(n_heads):
        q = qkv[:, :, h * hd:(h + 1) * hd]                         # (bs, N, hd) bf16
        k = qkv[:, :, dim + h * hd: dim + (h + 1) * hd]
        v = qkv[:, :, 2 * dim + h * hd: 2 * dim + (h + 1) * hd]

        # scores: contract hd directly, bf16 operands, f32 accumulation
        s = jnp.einsum('bqd,bkd->bqk', q, k,
                       preferred_element_type=jnp.float32)         # (bs, N, N)
        if apply_mask:
            s = s + add_mask

        # numerically-stable softmax in f32; normalize after the PV matmul
        m = jnp.max(s, axis=-1, keepdims=True)
        p = jnp.exp(s - m)
        denom = jnp.sum(p, axis=-1, keepdims=True)                 # f32

        o = jnp.einsum('bqk,bkd->bqd', p.astype(jnp.bfloat16), v,
                       preferred_element_type=jnp.float32)         # (bs, N, hd)
        o = o * pl.reciprocal(denom, approx=True)
        head_outs.append(o.astype(jnp.bfloat16))

    # ---- full-width output projection ----------------------------------------
    cat = jnp.concatenate(head_outs, axis=-1)                      # (bs, N, D) bf16
    out = jnp.dot(cat.reshape(bs * n_pad, dim), wp_ref[...],
                  preferred_element_type=jnp.float32) + bp_ref[...]
    out_ref[...] = out.reshape(bs, n_pad, dim).astype(out_ref.dtype)


def self_attention(x, w_qkv, b_qkv, w_proj, b_proj, *, n_heads, max_bs=4):
    """x: (B, N, D) f32. w_qkv: (3D, D), b_qkv: (3D,), w_proj: (D, D), b_proj: (D,)
    (PyTorch nn.Linear convention: y = x @ W.T + b)."""
    B, N, D = x.shape
    assert D % n_heads == 0
    hd = D // n_heads
    scale = hd ** (-0.5)

    # Pad tokens to a sublane multiple of 8 (ViT's N = n_patches + 1 is usually odd).
    n_pad = ((N + 7) // 8) * 8
    x_in = x.astype(jnp.bfloat16)                    # bf16 at the HBM boundary
    if n_pad != N:
        x_in = jnp.pad(x_in, ((0, 0), (0, n_pad - N), (0, 0)))

    # Batch block size: largest divisor of B <= max_bs, but keep >= 2 grid steps
    # when B >= 2 so both v7x TensorCores get work on the "parallel" batch axis.
    bs_cap = min(max_bs, B)
    if B >= 2:
        bs_cap = min(bs_cap, max(1, B // 2))
    bs = 1
    for cand in range(1, bs_cap + 1):
        if B % cand == 0:
            bs = cand
    grid = (B // bs,)

    # --- weight prep (plain JAX, done once) -----------------------------------
    # Fused QKV weights laid out column-wise as [q (H,hd) | k | v]; fold the
    # softmax scale into the q columns/bias (free).
    scale_vec = jnp.concatenate([jnp.full((D,), scale, jnp.float32),
                                 jnp.ones((2 * D,), jnp.float32)])
    w_all = (w_qkv.T.astype(jnp.float32) * scale_vec[None, :]).astype(jnp.bfloat16)  # (D, 3D)
    b_all = (b_qkv.astype(jnp.float32) * scale_vec).reshape(1, 3 * D)                # (1, 3D)
    w_p = w_proj.T.astype(jnp.bfloat16)                                              # (D, D)
    b_p = b_proj.reshape(1, D).astype(jnp.float32)                                   # (1, D)

    # Hoisted additive key-padding mask (0 for valid keys, -1e30 for pad keys).
    apply_mask = n_pad != N
    key_mask = jnp.where(jnp.arange(n_pad) < N, 0.0, -1e30).astype(
        jnp.float32).reshape(1, n_pad)

    kernel = functools.partial(_self_attention_kernel,
                               n_heads=n_heads, apply_mask=apply_mask)

    flops = B * (2 * n_pad * D * 3 * D                 # QKV projection
                 + 4 * n_heads * n_pad * n_pad * hd    # Q.K^T + P.V
                 + 2 * n_pad * D * D)                  # output projection
    transcendentals = B * n_heads * n_pad * n_pad
    bytes_accessed = (B * n_pad * D * (2 + 4)          # x (bf16) in + out (f32)
                      + (3 * D * D + D * D) * 2        # bf16 weights, fetched once
                      + (3 * D + D) * 4 + n_pad * 4)   # biases + mask
    cost = pl.CostEstimate(flops=flops, transcendentals=transcendentals,
                           bytes_accessed=bytes_accessed)

    out = pl.pallas_call(
        kernel,
        out_shape=jax.ShapeDtypeStruct((B, n_pad, D), jnp.float32),
        grid_spec=pltpu.PrefetchScalarGridSpec(
            num_scalar_prefetch=0,
            grid=grid,
            in_specs=[
                pl.BlockSpec((bs, n_pad, D), lambda b: (b, 0, 0)),   # x block
                pl.BlockSpec((D, 3 * D), lambda b: (0, 0)),          # w_qkv (resident)
                pl.BlockSpec((1, 3 * D), lambda b: (0, 0)),          # b_qkv
                pl.BlockSpec((D, D), lambda b: (0, 0)),              # w_proj
                pl.BlockSpec((1, D), lambda b: (0, 0)),              # b_proj
                pl.BlockSpec((1, n_pad), lambda b: (0, 0)),          # key mask
            ],
            out_specs=pl.BlockSpec((bs, n_pad, D), lambda b: (b, 0, 0)),
        ),
        compiler_params=pltpu.CompilerParams(
            dimension_semantics=("parallel",),
            vmem_limit_bytes=48 * 1024 * 1024),
        cost_estimate=cost,
    )(x_in, w_all, b_all, w_p, b_p, key_mask)

    if n_pad != N:
        out = out[:, :N, :]
    return out


def _reference(x, w_qkv, b_qkv, w_proj, b_proj, n_heads):
    """Pure-JAX (f32) reference mirroring the PyTorch forward."""
    B, N, D = x.shape
    hd = D // n_heads
    scale = hd ** (-0.5)
    qkv = x @ w_qkv.T + b_qkv                                    # (B, N, 3D)
    qkv = qkv.reshape(B, N, 3, n_heads, hd).transpose(2, 0, 3, 1, 4)
    q, k, v = qkv[0], qkv[1], qkv[2]                             # (B, H, N, hd)
    dp = jnp.einsum("bhqd,bhkd->bhqk", q, k) * scale
    attn = jax.nn.softmax(dp, axis=-1)
    wa = jnp.einsum("bhqk,bhkd->bhqd", attn, v)                  # (B, H, N, hd)
    wa = wa.transpose(0, 2, 1, 3).reshape(B, N, D)
    return wa @ w_proj.T + b_proj


if __name__ == "__main__":
    # Small ViT-like shapes: N = n_patches + 1 = 9 (odd -> exercises the pad/mask path).
    B, N, D = 2, 9, 32
    n_heads = 4

    key = jax.random.PRNGKey(0)
    kx, kw1, kb1, kw2, kb2 = jax.random.split(key, 5)

    x = jax.random.normal(kx, (B, N, D), dtype=jnp.float32)
    w_qkv = jax.random.normal(kw1, (3 * D, D), dtype=jnp.float32) * 0.02
    b_qkv = jax.random.normal(kb1, (3 * D,), dtype=jnp.float32) * 0.02
    w_proj = jax.random.normal(kw2, (D, D), dtype=jnp.float32) * 0.02
    b_proj = jax.random.normal(kb2, (D,), dtype=jnp.float32) * 0.02

    out = self_attention(x, w_qkv, b_qkv, w_proj, b_proj, n_heads=n_heads)
    out = jax.block_until_ready(out)

    ref = _reference(x, w_qkv, b_qkv, w_proj, b_proj, n_heads)
    assert out.shape == (B, N, D)
    # bf16 matmul operands + approx reciprocal -> tolerance loosened vs pure f32.
    assert jnp.allclose(out, ref, atol=1e-2, rtol=5e-2), "mismatch vs reference"

    print("KERNEL_OK")
</pallas_src>

<mosaic_0001>
module attributes {stable_mosaic.version = 11 : i64} {
  func.func @_self_attention_kernel(%arg0: i32, %arg1: memref<1x16x32xbf16, #tpu.memory_space<vmem>>, %arg2: memref<32x96xbf16, #tpu.memory_space<vmem>>, %arg3: memref<1x96xf32, #tpu.memory_space<vmem>>, %arg4: memref<32x32xbf16, #tpu.memory_space<vmem>>, %arg5: memref<1x32xf32, #tpu.memory_space<vmem>>, %arg6: memref<1x16xf32, #tpu.memory_space<vmem>>, %arg7: memref<1x16x32xf32, #tpu.memory_space<vmem>>) attributes {dimension_semantics = [#tpu.dimension_semantics<parallel>], iteration_bounds = array<i64: 2>, scalar_prefetch = 0 : i64, scratch_operands = 0 : i64, tpu.core_type = #tpu.core_type<tc>, window_params = [{transform_indices = @transform_0, window_bounds = array<i64: 1, 16, 32>}, {pipeline_mode = #tpu.pipeline_mode<synchronous>, transform_indices = @transform_1, window_bounds = array<i64: 32, 96>}, {pipeline_mode = #tpu.pipeline_mode<synchronous>, transform_indices = @transform_2, window_bounds = array<i64: 1, 96>}, {pipeline_mode = #tpu.pipeline_mode<synchronous>, transform_indices = @transform_3, window_bounds = array<i64: 32, 32>}, {pipeline_mode = #tpu.pipeline_mode<synchronous>, transform_indices = @transform_4, window_bounds = array<i64: 1, 32>}, {pipeline_mode = #tpu.pipeline_mode<synchronous>, transform_indices = @transform_5, window_bounds = array<i64: 1, 16>}, {transform_indices = @transform_6, window_bounds = array<i64: 1, 16, 32>}]} {
    %c0 = arith.constant 0 : index
    %c0_0 = arith.constant 0 : index
    %c0_1 = arith.constant 0 : index
    %0 = vector.load %arg1[%c0, %c0_0, %c0_1] : memref<1x16x32xbf16, #tpu.memory_space<vmem>>, vector<1x16x32xbf16>
    %1 = vector.shape_cast %0 : vector<1x16x32xbf16> to vector<16x32xbf16>
    %c0_2 = arith.constant 0 : index
    %c0_3 = arith.constant 0 : index
    %2 = vector.load %arg2[%c0_2, %c0_3] : memref<32x96xbf16, #tpu.memory_space<vmem>>, vector<32x96xbf16>
    %cst = arith.constant dense<0.000000e+00> : vector<16x96xf32>
    %3 = tpu.matmul %1, %2, %cst {dimension_numbers = #tpu.dot_dimension_numbers<[1], [0], [0], [1], [0, 0, 1, 1], [], []>} : vector<16x32xbf16>, vector<32x96xbf16>, vector<16x96xf32> -> vector<16x96xf32>
    %c0_4 = arith.constant 0 : index
    %c0_5 = arith.constant 0 : index
    %4 = vector.load %arg3[%c0_4, %c0_5] : memref<1x96xf32, #tpu.memory_space<vmem>>, vector<1x96xf32>
    %5 = vector.broadcast %4 : vector<1x96xf32> to vector<16x96xf32>
    %6 = arith.addf %3, %5 : vector<16x96xf32>
    %7 = arith.truncf %6 : vector<16x96xf32> to vector<16x96xbf16>
    %8 = vector.shape_cast %7 : vector<16x96xbf16> to vector<1x16x96xbf16>
    %c0_6 = arith.constant 0 : index
    %c0_7 = arith.constant 0 : index
    %9 = vector.load %arg6[%c0_6, %c0_7] : memref<1x16xf32, #tpu.memory_space<vmem>>, vector<1x16xf32>
    %10 = vector.shape_cast %9 : vector<1x16xf32> to vector<1x1x16xf32>
    %11 = vector.extract_strided_slice %8 {offsets = [0, 0, 0], sizes = [1, 16, 8], strides = [1, 1, 1]} : vector<1x16x96xbf16> to vector<1x16x8xbf16>
    %12 = vector.extract_strided_slice %8 {offsets = [0, 0, 32], sizes = [1, 16, 8], strides = [1, 1, 1]} : vector<1x16x96xbf16> to vector<1x16x8xbf16>
    %13 = vector.extract_strided_slice %8 {offsets = [0, 0, 64], sizes = [1, 16, 8], strides = [1, 1, 1]} : vector<1x16x96xbf16> to vector<1x16x8xbf16>
    "tpu.trace_start"() <{level = 10 : i32, message = "bqd,bkd->bqk"}> : () -> ()
    %cst_8 = arith.constant dense<0.000000e+00> : vector<1x16x16xf32>
    %14 = tpu.matmul %11, %12, %cst_8 {dimension_numbers = #tpu.dot_dimension_numbers<[2], [2], [1], [1], [0, 0, 0, 1, 1, 1], [0], [0]>} : vector<1x16x8xbf16>, vector<1x16x8xbf16>, vector<1x16x16xf32> -> vector<1x16x16xf32>
    "tpu.trace_stop"() : () -> ()
    %15 = vector.broadcast %10 : vector<1x1x16xf32> to vector<1x16x16xf32>
    %16 = arith.addf %14, %15 : vector<1x16x16xf32>
    %cst_9 = arith.constant dense<0xFF800000> : vector<1x16xf32>
    %17 = vector.multi_reduction <maximumf>, %16, %cst_9 [2] : vector<1x16x16xf32> to vector<1x16xf32>
    %18 = vector.shape_cast %17 : vector<1x16xf32> to vector<1x16x1xf32>
    %19 = vector.broadcast %18 : vector<1x16x1xf32> to vector<1x16x16xf32>
    %20 = arith.subf %16, %19 : vector<1x16x16xf32>
    %21 = math.exp %20 : vector<1x16x16xf32>
    %cst_10 = arith.constant dense<0.000000e+00> : vector<1x16xf32>
    %22 = vector.multi_reduction <add>, %21, %cst_10 [2] : vector<1x16x16xf32> to vector<1x16xf32>
    %23 = vector.shape_cast %22 : vector<1x16xf32> to vector<1x16x1xf32>
    %24 = arith.truncf %21 : vector<1x16x16xf32> to vector<1x16x16xbf16>
    "tpu.trace_start"() <{level = 10 : i32, message = "bqk,bkd->bqd"}> : () -> ()
    %cst_11 = arith.constant dense<0.000000e+00> : vector<1x16x8xf32>
    %25 = tpu.matmul %24, %13, %cst_11 {dimension_numbers = #tpu.dot_dimension_numbers<[2], [1], [1], [2], [0, 0, 0, 1, 1, 2], [0], [0]>} : vector<1x16x16xbf16>, vector<1x16x8xbf16>, vector<1x16x8xf32> -> vector<1x16x8xf32>
    "tpu.trace_stop"() : () -> ()
    %26 = tpu.reciprocal %23 {approx = true} : vector<1x16x1xf32> -> vector<1x16x1xf32>
    %27 = vector.broadcast %26 : vector<1x16x1xf32> to vector<1x16x8xf32>
    %28 = arith.mulf %25, %27 : vector<1x16x8xf32>
    %29 = arith.truncf %28 : vector<1x16x8xf32> to vector<1x16x8xbf16>
    %30 = vector.extract_strided_slice %8 {offsets = [0, 0, 8], sizes = [1, 16, 8], strides = [1, 1, 1]} : vector<1x16x96xbf16> to vector<1x16x8xbf16>
    %31 = vector.extract_strided_slice %8 {offsets = [0, 0, 40], sizes = [1, 16, 8], strides = [1, 1, 1]} : vector<1x16x96xbf16> to vector<1x16x8xbf16>
    %32 = vector.extract_strided_slice %8 {offsets = [0, 0, 72], sizes = [1, 16, 8], strides = [1, 1, 1]} : vector<1x16x96xbf16> to vector<1x16x8xbf16>
    "tpu.trace_start"() <{level = 10 : i32, message = "bqd,bkd->bqk"}> : () -> ()
    %cst_12 = arith.constant dense<0.000000e+00> : vector<1x16x16xf32>
    %33 = tpu.matmul %30, %31, %cst_12 {dimension_numbers = #tpu.dot_dimension_numbers<[2], [2], [1], [1], [0, 0, 0, 1, 1, 1], [0], [0]>} : vector<1x16x8xbf16>, vector<1x16x8xbf16>, vector<1x16x16xf32> -> vector<1x16x16xf32>
    "tpu.trace_stop"() : () -> ()
    %34 = vector.broadcast %10 : vector<1x1x16xf32> to vector<1x16x16xf32>
    %35 = arith.addf %33, %34 : vector<1x16x16xf32>
    %cst_13 = arith.constant dense<0xFF800000> : vector<1x16xf32>
    %36 = vector.multi_reduction <maximumf>, %35, %cst_13 [2] : vector<1x16x16xf32> to vector<1x16xf32>
    %37 = vector.shape_cast %36 : vector<1x16xf32> to vector<1x16x1xf32>
    %38 = vector.broadcast %37 : vector<1x16x1xf32> to vector<1x16x16xf32>
    %39 = arith.subf %35, %38 : vector<1x16x16xf32>
    %40 = math.exp %39 : vector<1x16x16xf32>
    %cst_14 = arith.constant dense<0.000000e+00> : vector<1x16xf32>
    %41 = vector.multi_reduction <add>, %40, %cst_14 [2] : vector<1x16x16xf32> to vector<1x16xf32>
    %42 = vector.shape_cast %41 : vector<1x16xf32> to vector<1x16x1xf32>
    %43 = arith.truncf %40 : vector<1x16x16xf32> to vector<1x16x16xbf16>
    "tpu.trace_start"() <{level = 10 : i32, message = "bqk,bkd->bqd"}> : () -> ()
    %cst_15 = arith.constant dense<0.000000e+00> : vector<1x16x8xf32>
    %44 = tpu.matmul %43, %32, %cst_15 {dimension_numbers = #tpu.dot_dimension_numbers<[2], [1], [1], [2], [0, 0, 0, 1, 1, 2], [0], [0]>} : vector<1x16x16xbf16>, vector<1x16x8xbf16>, vector<1x16x8xf32> -> vector<1x16x8xf32>
    "tpu.trace_stop"() : () -> ()
    %45 = tpu.reciprocal %42 {approx = true} : vector<1x16x1xf32> -> vector<1x16x1xf32>
    %46 = vector.broadcast %45 : vector<1x16x1xf32> to vector<1x16x8xf32>
    %47 = arith.mulf %44, %46 : vector<1x16x8xf32>
    %48 = arith.truncf %47 : vector<1x16x8xf32> to vector<1x16x8xbf16>
    %49 = vector.extract_strided_slice %8 {offsets = [0, 0, 16], sizes = [1, 16, 8], strides = [1, 1, 1]} : vector<1x16x96xbf16> to vector<1x16x8xbf16>
    %50 = vector.extract_strided_slice %8 {offsets = [0, 0, 48], sizes = [1, 16, 8], strides = [1, 1, 1]} : vector<1x16x96xbf16> to vector<1x16x8xbf16>
    %51 = vector.extract_strided_slice %8 {offsets = [0, 0, 80], sizes = [1, 16, 8], strides = [1, 1, 1]} : vector<1x16x96xbf16> to vector<1x16x8xbf16>
    "tpu.trace_start"() <{level = 10 : i32, message = "bqd,bkd->bqk"}> : () -> ()
    %cst_16 = arith.constant dense<0.000000e+00> : vector<1x16x16xf32>
    %52 = tpu.matmul %49, %50, %cst_16 {dimension_numbers = #tpu.dot_dimension_numbers<[2], [2], [1], [1], [0, 0, 0, 1, 1, 1], [0], [0]>} : vector<1x16x8xbf16>, vector<1x16x8xbf16>, vector<1x16x16xf32> -> vector<1x16x16xf32>
    "tpu.trace_stop"() : () -> ()
    %53 = vector.broadcast %10 : vector<1x1x16xf32> to vector<1x16x16xf32>
    %54 = arith.addf %52, %53 : vector<1x16x16xf32>
    %cst_17 = arith.constant dense<0xFF800000> : vector<1x16xf32>
    %55 = vector.multi_reduction <maximumf>, %54, %cst_17 [2] : vector<1x16x16xf32> to vector<1x16xf32>
    %56 = vector.shape_cast %55 : vector<1x16xf32> to vector<1x16x1xf32>
    %57 = vector.broadcast %56 : vector<1x16x1xf32> to vector<1x16x16xf32>
    %58 = arith.subf %54, %57 : vector<1x16x16xf32>
    %59 = math.exp %58 : vector<1x16x16xf32>
    %cst_18 = arith.constant dense<0.000000e+00> : vector<1x16xf32>
    %60 = vector.multi_reduction <add>, %59, %cst_18 [2] : vector<1x16x16xf32> to vector<1x16xf32>
    %61 = vector.shape_cast %60 : vector<1x16xf32> to vector<1x16x1xf32>
    %62 = arith.truncf %59 : vector<1x16x16xf32> to vector<1x16x16xbf16>
    "tpu.trace_start"() <{level = 10 : i32, message = "bqk,bkd->bqd"}> : () -> ()
    %cst_19 = arith.constant dense<0.000000e+00> : vector<1x16x8xf32>
    %63 = tpu.matmul %62, %51, %cst_19 {dimension_numbers = #tpu.dot_dimension_numbers<[2], [1], [1], [2], [0, 0, 0, 1, 1, 2], [0], [0]>} : vector<1x16x16xbf16>, vector<1x16x8xbf16>, vector<1x16x8xf32> -> vector<1x16x8xf32>
    "tpu.trace_stop"() : () -> ()
    %64 = tpu.reciprocal %61 {approx = true} : vector<1x16x1xf32> -> vector<1x16x1xf32>
    %65 = vector.broadcast %64 : vector<1x16x1xf32> to vector<1x16x8xf32>
    %66 = arith.mulf %63, %65 : vector<1x16x8xf32>
    %67 = arith.truncf %66 : vector<1x16x8xf32> to vector<1x16x8xbf16>
    %68 = vector.extract_strided_slice %8 {offsets = [0, 0, 24], sizes = [1, 16, 8], strides = [1, 1, 1]} : vector<1x16x96xbf16> to vector<1x16x8xbf16>
    %69 = vector.extract_strided_slice %8 {offsets = [0, 0, 56], sizes = [1, 16, 8], strides = [1, 1, 1]} : vector<1x16x96xbf16> to vector<1x16x8xbf16>
    %70 = vector.extract_strided_slice %8 {offsets = [0, 0, 88], sizes = [1, 16, 8], strides = [1, 1, 1]} : vector<1x16x96xbf16> to vector<1x16x8xbf16>
    "tpu.trace_start"() <{level = 10 : i32, message = "bqd,bkd->bqk"}> : () -> ()
    %cst_20 = arith.constant dense<0.000000e+00> : vector<1x16x16xf32>
    %71 = tpu.matmul %68, %69, %cst_20 {dimension_numbers = #tpu.dot_dimension_numbers<[2], [2], [1], [1], [0, 0, 0, 1, 1, 1], [0], [0]>} : vector<1x16x8xbf16>, vector<1x16x8xbf16>, vector<1x16x16xf32> -> vector<1x16x16xf32>
    "tpu.trace_stop"() : () -> ()
    %72 = vector.broadcast %10 : vector<1x1x16xf32> to vector<1x16x16xf32>
    %73 = arith.addf %71, %72 : vector<1x16x16xf32>
    %cst_21 = arith.constant dense<0xFF800000> : vector<1x16xf32>
    %74 = vector.multi_reduction <maximumf>, %73, %cst_21 [2] : vector<1x16x16xf32> to vector<1x16xf32>
    %75 = vector.shape_cast %74 : vector<1x16xf32> to vector<1x16x1xf32>
    %76 = vector.broadcast %75 : vector<1x16x1xf32> to vector<1x16x16xf32>
    %77 = arith.subf %73, %76 : vector<1x16x16xf32>
    %78 = math.exp %77 : vector<1x16x16xf32>
    %cst_22 = arith.constant dense<0.000000e+00> : vector<1x16xf32>
    %79 = vector.multi_reduction <add>, %78, %cst_22 [2] : vector<1x16x16xf32> to vector<1x16xf32>
    %80 = vector.shape_cast %79 : vector<1x16xf32> to vector<1x16x1xf32>
    %81 = arith.truncf %78 : vector<1x16x16xf32> to vector<1x16x16xbf16>
    "tpu.trace_start"() <{level = 10 : i32, message = "bqk,bkd->bqd"}> : () -> ()
    %cst_23 = arith.constant dense<0.000000e+00> : vector<1x16x8xf32>
    %82 = tpu.matmul %81, %70, %cst_23 {dimension_numbers = #tpu.dot_dimension_numbers<[2], [1], [1], [2], [0, 0, 0, 1, 1, 2], [0], [0]>} : vector<1x16x16xbf16>, vector<1x16x8xbf16>, vector<1x16x8xf32> -> vector<1x16x8xf32>
    "tpu.trace_stop"() : () -> ()
    %83 = tpu.reciprocal %80 {approx = true} : vector<1x16x1xf32> -> vector<1x16x1xf32>
    %84 = vector.broadcast %83 : vector<1x16x1xf32> to vector<1x16x8xf32>
    %85 = arith.mulf %82, %84 : vector<1x16x8xf32>
    %86 = arith.truncf %85 : vector<1x16x8xf32> to vector<1x16x8xbf16>
    %87 = tpu.concatenate %29, %48, %67, %86 in 2 : vector<1x16x8xbf16>, vector<1x16x8xbf16>, vector<1x16x8xbf16>, vector<1x16x8xbf16> -> vector<1x16x32xbf16>
    %88 = vector.shape_cast %87 : vector<1x16x32xbf16> to vector<16x32xbf16>
    %c0_24 = arith.constant 0 : index
    %c0_25 = arith.constant 0 : index
    %89 = vector.load %arg4[%c0_24, %c0_25] : memref<32x32xbf16, #tpu.memory_space<vmem>>, vector<32x32xbf16>
    %cst_26 = arith.constant dense<0.000000e+00> : vector<16x32xf32>
    %90 = tpu.matmul %88, %89, %cst_26 {dimension_numbers = #tpu.dot_dimension_numbers<[1], [0], [0], [1], [0, 0, 1, 1], [], []>} : vector<16x32xbf16>, vector<32x32xbf16>, vector<16x32xf32> -> vector<16x32xf32>
    %c0_27 = arith.constant 0 : index
    %c0_28 = arith.constant 0 : index
    %91 = vector.load %arg5[%c0_27, %c0_28] : memref<1x32xf32, #tpu.memory_space<vmem>>, vector<1x32xf32>
    %92 = vector.broadcast %91 : vector<1x32xf32> to vector<16x32xf32>
    %93 = arith.addf %90, %92 : vector<16x32xf32>
    %94 = vector.shape_cast %93 : vector<16x32xf32> to vector<1x16x32xf32>
    %c0_29 = arith.constant 0 : index
    %c0_30 = arith.constant 0 : index
    %c0_31 = arith.constant 0 : index
    %95 = vector.load %arg7[%c0_29, %c0_30, %c0_31] : memref<1x16x32xf32, #tpu.memory_space<vmem>>, vector<1x16x32xf32>
    tpu.vector_store %arg7[%c0_29, %c0_30, %c0_31], %94 {strides = array<i32>} : memref<1x16x32xf32, #tpu.memory_space<vmem>>, vector<1x16x32xf32>,
    return
  }
  func.func @transform_0(%arg0: i32) -> (i32, i32, i32) {
    %c0_i32 = arith.constant 0 : i32
    %c0_i32_0 = arith.constant 0 : i32
    %c0_i32_1 = arith.constant 0 : i32
    return %arg0, %c0_i32, %c0_i32_0 : i32, i32, i32
  }
  func.func @transform_1(%arg0: i32) -> (i32, i32) {
    %c0_i32 = arith.constant 0 : i32
    %c0_i32_0 = arith.constant 0 : i32
    %c0_i32_1 = arith.constant 0 : i32
    return %c0_i32, %c0_i32_0 : i32, i32
  }
  func.func @transform_2(%arg0: i32) -> (i32, i32) {
    %c0_i32 = arith.constant 0 : i32
    %c0_i32_0 = arith.constant 0 : i32
    %c0_i32_1 = arith.constant 0 : i32
    return %c0_i32, %c0_i32_0 : i32, i32
  }
  func.func @transform_3(%arg0: i32) -> (i32, i32) {
    %c0_i32 = arith.constant 0 : i32
    %c0_i32_0 = arith.constant 0 : i32
    %c0_i32_1 = arith.constant 0 : i32
    return %c0_i32, %c0_i32_0 : i32, i32
  }
  func.func @transform_4(%arg0: i32) -> (i32, i32) {
    %c0_i32 = arith.constant 0 : i32
    %c0_i32_0 = arith.constant 0 : i32
    %c0_i32_1 = arith.constant 0 : i32
    return %c0_i32, %c0_i32_0 : i32, i32
  }
  func.func @transform_5(%arg0: i32) -> (i32, i32) {
    %c0_i32 = arith.constant 0 : i32
    %c0_i32_0 = arith.constant 0 : i32
    %c0_i32_1 = arith.constant 0 : i32
    return %c0_i32, %c0_i32_0 : i32, i32
  }
  func.func @transform_6(%arg0: i32) -> (i32, i32, i32) {
    %c0_i32 = arith.constant 0 : i32
    %c0_i32_0 = arith.constant 0 : i32
    %c0_i32_1 = arith.constant 0 : i32
    return %arg0, %c0_i32, %c0_i32_0 : i32, i32, i32
  }
}

</mosaic_0001>

<llo_original>
// kernel: tpu_custom_call.1
$region0: #{tpu_custom_call.1}
  #allocation0 [shape = 'u32[]', space=smem, size = 0x4, offset = 0x4, fixed_abs, tag = 'smem constant byte address 0x4 - core index']
  #allocation1 [shape = 'u32[144,128]{1,0:T(1,128)}', space=vmem, size = 0x12000, scoped, tag = 'internal scratch']
  %s0 = inlined_call_operand.hbm [shape: bf16[2,16,32], index: 0, kind: input, shape index: {}]
  %s1 = inlined_call_operand.hbm [shape: bf16[32,96], index: 1, kind: input, shape index: {}]
  %s2 = inlined_call_operand.vmem [shape: f32[1,96], index: 2, kind: input, shape index: {}]
  %s3 = inlined_call_operand.hbm [shape: bf16[32,32], index: 3, kind: input, shape index: {}]
  %s4 = inlined_call_operand.vmem [shape: f32[1,32], index: 4, kind: input, shape index: {}]
  %s5 = inlined_call_operand.vmem [shape: f32[1,16], index: 5, kind: input, shape index: {}]
  %s6 = inlined_call_operand.hbm [shape: f32[2,16,32], index: 6, kind: output, shape index: {}]
  %s7 = sld [smem:[#allocation0]]
  $region69: #{tpu_custom_call.1} parent=0
    _
  %s9 = ssub.s32 1, %s7
  %s10 = scalar_select 0, %s9, %s7
  $region1: #{tpu_custom_call.1} parent=0
    #allocation2 [shape = 'u8[8192]{0}', space=vmem, size = 0x2000, scoped, tag = 'input window, operand 0']
    #allocation3 [shape = 's32[2]{0}', space=sflag, size = 0x8, scoped, tag = 'scoped memory for tpu_custom_call.1']
    #allocation4 [shape = 's32[2]{0}', space=sflag, size = 0x8, scoped, tag = 'scoped memory for tpu_custom_call.1']
    #allocation5 [shape = 'u8[8192]{0}', space=vmem, size = 0x2000, scoped, tag = 'input window, operand 1, single buffered']
    #allocation6 [shape = 's32[1]{0}', space=sflag, size = 0x4, scoped, tag = 'scoped memory for tpu_custom_call.1']
    #allocation7 [shape = 'u8[8192]{0}', space=vmem, size = 0x2000, scoped, tag = 'input window, operand 3, single buffered']
    #allocation8 [shape = 'u8[16384]{0}', space=vmem, size = 0x4000, scoped, tag = 'output window, operand 0']
    %11 = vsyncpa [#allocation3], 0
    %s12 = scalar_lea.sflag [#allocation3], 1
    %13 = vsyncpa %s12, 0
    %14 = vsyncpa [#allocation6], 0
    %15 = vsyncpa [#allocation4], 0
    %s16 = scalar_lea.sflag [#allocation4], 1
    %17 = vsyncpa %s16, 0
    loop: start=0, step=1, limit=4
    $region2: #{tpu_custom_call.1} parent=1 // loop_pre_header
      _
    $region3: #{tpu_custom_call.1} parent=1 // loop_header
      %s19 = sphi 0, %s23
      %p20 = scmp.ge.s32.totalorder %s19, 4
      %s29 = sphi 0, %s31
      %s32 = sphi 0, %s29
      %s33 = sphi 0, %s32
      %s49 = sphi 0, %s33
      %s53 = sphi 0, %s53
      %s55 = sphi 0, %s53
      %s56 = sphi 0, %s55
      %s70 = sphi 0, %s56
      %s74 = sphi 0, %s74
      %s76 = sphi 0, %s74
      %s77 = sphi 0, %s76
      %s91 = sphi 0, %s77
      %s95 = sphi 0, %s95
      %s97 = sphi 0, %s95
      %s98 = sphi 0, %s97
      %s112 = sphi 0, %s98
      %s116 = sphi 0, %s116
      %s118 = sphi 0, %s116
      %s119 = sphi 0, %s118
      %s133 = sphi 0, %s119
      %s137 = sphi 0, %s137
      %s139 = sphi 0, %s137
      %s140 = sphi 0, %s139
      %s154 = sphi 0, %s140
      %s160 = sphi 0, %s162
      %s163 = sphi 0, %s160
      %s164 = sphi 0, %s163
      %s180 = sphi 0, %s164
    $region4: #{tpu_custom_call.1} parent=1 // loop_header_branch
      %22 = sbr.rel (%p20) target = $region8
    $region5: #{tpu_custom_call.1} parent=1 // loop_body
      %s24 = ssub.s32 %s19, 1
      %s25 = ssub.s32 %s19, 2
      %s26 = sadd.s32 %s19, 1
      %s27 = ssub.s32 %s19, %s26
      %p28 = scmp.eq.s32.totalorder %s27, 0
      %s30 = sadd.s32 %s29, 1
      %s31 = scalar_select %p28, %s29, %s30
      %p34 = pneg %p28
      %p35 = scmp.eq.s32.totalorder %s19, 1
      %p36 = por %p34, %p35
      %p37 = scmp.ne.s32.totalorder %s29, %s32
      %p38 = scmp.eq.s32.totalorder %s19, 0
      %p39 = por %p37, %p38
      %p40 = scmp.ne.s32.totalorder %s29, %s32
      %p41 = scmp.eq.s32.totalorder %s24, 1
      %p42 = por %p40, %p41
      %p43 = scmp.ne.s32.totalorder %s32, %s33
      %p44 = scmp.eq.s32.totalorder %s24, 0
      %p45 = por %p43, %p44
      %p46 = scmp.ne.s32.totalorder %s32, %s33
      %p47 = scmp.eq.s32.totalorder %s25, 1
      %p48 = por %p46, %p47
      %p50 = scmp.ne.s32.totalorder %s33, %s49
      %p51 = scmp.eq.s32.totalorder %s25, 0
      %p52 = por %p50, %p51
      %s54 = sadd.s32 %s53, 1
      %p57 = scmp.eq.s32.totalorder %s19, 1
      %p58 = scmp.ne.s32.totalorder %s53, %s55
      %p59 = scmp.eq.s32.totalorder %s19, 0
      %p60 = por %p58, %p59
      %p61 = scmp.ne.s32.totalorder %s53, %s55
      %p62 = scmp.eq.s32.totalorder %s24, 1
      %p63 = por %p61, %p62
      %p64 = scmp.ne.s32.totalorder %s55, %s56
      %p65 = scmp.eq.s32.totalorder %s24, 0
      %p66 = por %p64, %p65
      %p67 = scmp.ne.s32.totalorder %s55, %s56
      %p68 = scmp.eq.s32.totalorder %s25, 1
      %p69 = por %p67, %p68
      %p71 = scmp.ne.s32.totalorder %s56, %s70
      %p72 = scmp.eq.s32.totalorder %s25, 0
      %p73 = por %p71, %p72
      %s75 = sadd.s32 %s74, 1
      %p78 = scmp.eq.s32.totalorder %s19, 1
      %p79 = scmp.ne.s32.totalorder %s74, %s76
      %p80 = scmp.eq.s32.totalorder %s19, 0
      %p81 = por %p79, %p80
      %p82 = scmp.ne.s32.totalorder %s74, %s76
      %p83 = scmp.eq.s32.totalorder %s24, 1
      %p84 = por %p82, %p83
      %p85 = scmp.ne.s32.totalorder %s76, %s77
      %p86 = scmp.eq.s32.totalorder %s24, 0
      %p87 = por %p85, %p86
      %p88 = scmp.ne.s32.totalorder %s76, %s77
      %p89 = scmp.eq.s32.totalorder %s25, 1
      %p90 = por %p88, %p89
      %p92 = scmp.ne.s32.totalorder %s77, %s91
      %p93 = scmp.eq.s32.totalorder %s25, 0
      %p94 = por %p92, %p93
      %s96 = sadd.s32 %s95, 1
      %p99 = scmp.eq.s32.totalorder %s19, 1
      %p100 = scmp.ne.s32.totalorder %s95, %s97
      %p101 = scmp.eq.s32.totalorder %s19, 0
      %p102 = por %p100, %p101
      %p103 = scmp.ne.s32.totalorder %s95, %s97
      %p104 = scmp.eq.s32.totalorder %s24, 1
      %p105 = por %p103, %p104
      %p106 = scmp.ne.s32.totalorder %s97, %s98
      %p107 = scmp.eq.s32.totalorder %s24, 0
      %p108 = por %p106, %p107
      %p109 = scmp.ne.s32.totalorder %s97, %s98
      %p110 = scmp.eq.s32.totalorder %s25, 1
      %p111 = por %p109, %p110
      %p113 = scmp.ne.s32.totalorder %s98, %s112
      %p114 = scmp.eq.s32.totalorder %s25, 0
      %p115 = por %p113, %p114
      %s117 = sadd.s32 %s116, 1
      %p120 = scmp.eq.s32.totalorder %s19, 1
      %p121 = scmp.ne.s32.totalorder %s116, %s118
      %p122 = scmp.eq.s32.totalorder %s19, 0
      %p123 = por %p121, %p122
      %p124 = scmp.ne.s32.totalorder %s116, %s118
      %p125 = scmp.eq.s32.totalorder %s24, 1
      %p126 = por %p124, %p125
      %p127 = scmp.ne.s32.totalorder %s118, %s119
      %p128 = scmp.eq.s32.totalorder %s24, 0
      %p129 = por %p127, %p128
      %p130 = scmp.ne.s32.totalorder %s118, %s119
      %p131 = scmp.eq.s32.totalorder %s25, 1
      %p132 = por %p130, %p131
      %p134 = scmp.ne.s32.totalorder %s119, %s133
      %p135 = scmp.eq.s32.totalorder %s25, 0
      %p136 = por %p134, %p135
      %s138 = sadd.s32 %s137, 1
      %p141 = scmp.eq.s32.totalorder %s19, 1
      %p142 = scmp.ne.s32.totalorder %s137, %s139
      %p143 = scmp.eq.s32.totalorder %s19, 0
      %p144 = por %p142, %p143
      %p145 = scmp.ne.s32.totalorder %s137, %s139
      %p146 = scmp.eq.s32.totalorder %s24, 1
      %p147 = por %p145, %p146
      %p148 = scmp.ne.s32.totalorder %s139, %s140
      %p149 = scmp.eq.s32.totalorder %s24, 0
      %p150 = por %p148, %p149
      %p151 = scmp.ne.s32.totalorder %s139, %s140
      %p152 = scmp.eq.s32.totalorder %s25, 1
      %p153 = por %p151, %p152
      %p155 = scmp.ne.s32.totalorder %s140, %s154
      %p156 = scmp.eq.s32.totalorder %s25, 0
      %p157 = por %p155, %p156
      %s158 = ssub.s32 %s19, %s26
      %p159 = scmp.eq.s32.totalorder %s158, 0
      %s161 = sadd.s32 %s160, 1
      %s162 = scalar_select %p159, %s160, %s161
      %p165 = pneg %p159
      %p166 = scmp.eq.s32.totalorder %s19, 1
      %p167 = por %p165, %p166
      %p168 = scmp.ne.s32.totalorder %s160, %s163
      %p169 = scmp.eq.s32.totalorder %s19, 0
      %p170 = por %p168, %p169
      %p171 = scmp.ne.s32.totalorder %s160, %s163
      %p172 = scmp.eq.s32.totalorder %s24, 1
      %p173 = por %p171, %p172
      %p174 = scmp.ne.s32.totalorder %s163, %s164
      %p175 = scmp.eq.s32.totalorder %s24, 0
      %p176 = por %p174, %p175
      %p177 = scmp.ne.s32.totalorder %s163, %s164
      %p178 = scmp.eq.s32.totalorder %s25, 1
      %p179 = por %p177, %p178
      %p181 = scmp.ne.s32.totalorder %s164, %s180
      %p182 = scmp.eq.s32.totalorder %s25, 0
      %p183 = por %p181, %p182
      %p184 = scmp.le.s32.totalorder 1, %s19
      %p185 = scmp.lt.s32.totalorder %s19, 3
      %p186 = pnand %p184, %p185
      %p187 = pneg %p186
      // Predicated region
      $region9: #{tpu_custom_call.1} parent=5 // pred_check
        _
      $region10: #{tpu_custom_call.1} parent=5 // pred_check_branch
        %189 = sbr.rel (%p186) target = $region12
      $region11: #{tpu_custom_call.1} parent=5 // pred_region
        %s190 = ssub.s32 %s19, 1
        // Predicated region
        $region13: #{tpu_custom_call.1} parent=11 // pred_check
          %p191 = pneg %p66
        $region14: #{tpu_custom_call.1} parent=11 // pred_check_branch
          %193 = sbr.rel (%p191) target = $region16
        $region15: #{tpu_custom_call.1} parent=11 // pred_region
          %s195 = ssub.s32 256, 256
          %196 = vsyncadd [#allocation6], %s195
          %s197 = sshll.u32 [#allocation5], 4
          %s198 = int_to_ptr.vmem [resolvable:$true] %s197
          %203 = dma.hbm_to_vmem [thread:$0]  %s1, 256, %s198, [#allocation6], 64, 64, 4
        $region16: #{tpu_custom_call.1} parent=11 // pred_fallthru
          _
        // Predicated region
        $region17: #{tpu_custom_call.1} parent=11 // pred_check
          %p204 = pneg %p87
        $region18: #{tpu_custom_call.1} parent=11 // pred_check_branch
          %206 = sbr.rel (%p204) target = $region20
        $region19: #{tpu_custom_call.1} parent=11 // pred_region
          _
        $region20: #{tpu_custom_call.1} parent=11 // pred_fallthru
          _
        // Predicated region
        $region21: #{tpu_custom_call.1} parent=11 // pred_check
          %p207 = pneg %p108
        $region22: #{tpu_custom_call.1} parent=11 // pred_check_branch
          %209 = sbr.rel (%p207) target = $region24
        $region23: #{tpu_custom_call.1} parent=11 // pred_region
          %s211 = ssub.s32 256, 256
          %212 = vsyncadd [#allocation6], %s211
          %s213 = sshll.u32 [#allocation7], 4
          %s214 = int_to_ptr.vmem [resolvable:$true] %s213
          %219 = dma.hbm_to_vmem [thread:$0]  %s3, 256, %s214, [#allocation6], 64, 64, 4
        $region24: #{tpu_custom_call.1} parent=11 // pred_fallthru
          _
        // Predicated region
        $region25: #{tpu_custom_call.1} parent=11 // pred_check
          %p220 = pneg %p129
        $region26: #{tpu_custom_call.1} parent=11 // pred_check_branch
          %222 = sbr.rel (%p220) target = $region28
        $region27: #{tpu_custom_call.1} parent=11 // pred_region
          _
        $region28: #{tpu_custom_call.1} parent=11 // pred_fallthru
          _
        // Predicated region
        $region29: #{tpu_custom_call.1} parent=11 // pred_check
          %p223 = pneg %p150
        $region30: #{tpu_custom_call.1} parent=11 // pred_check_branch
          %225 = sbr.rel (%p223) target = $region32
        $region31: #{tpu_custom_call.1} parent=11 // pred_region
          _
        $region32: #{tpu_custom_call.1} parent=11 // pred_fallthru
          _
      $region12: #{tpu_custom_call.1} parent=5 // pred_fallthru
        _
      %p226 = scmp.lt.s32.totalorder %s19, 2
      // Predicated region
      $region33: #{tpu_custom_call.1} parent=5 // pred_check
        %p227 = pneg %p226
      $region34: #{tpu_custom_call.1} parent=5 // pred_check_branch
        %229 = sbr.rel (%p227) target = $region36
      $region35: #{tpu_custom_call.1} parent=5 // pred_region
        // Predicated region
        $region37: #{tpu_custom_call.1} parent=35 // pred_check
          %p230 = pneg %p39
        $region38: #{tpu_custom_call.1} parent=35 // pred_check_branch
          %232 = sbr.rel (%p230) target = $region40
        $region39: #{tpu_custom_call.1} parent=35 // pred_region
          %s233 = sand.u32 %s29, 1
          %s234 = scalar_lea.sflag [#allocation3], %s233
          %s235 = sand.u32 %s29, 1
          %s236 = smul.addr %s235, 8
          %s237 = scalar_lea.vmem [#allocation2], %s236
          %s239 = ssub.s32 128, 128
          %240 = vsyncadd %s234, %s239
          %s241 = smul.addr %s19, 2
          %s242 = smul.addr %s241, 64
          %s243 = scalar_lea.hbm %s0, %s242
          %s244 = sshll.u32 %s237, 4
          %s245 = int_to_ptr.vmem [resolvable:$true] %s244
          %250 = dma.hbm_to_vmem [thread:$0]  %s243, 128, %s245, %s234, 64, 64, 4
        $region40: #{tpu_custom_call.1} parent=35 // pred_fallthru
          _
      $region36: #{tpu_custom_call.1} parent=5 // pred_fallthru
        _
      %p251 = scmp.le.s32.totalorder 1, %s19
      %p252 = scmp.lt.s32.totalorder %s19, 3
      %p253 = pnand %p251, %p252
      %p254 = pneg %p253
      // Predicated region
      $region41: #{tpu_custom_call.1} parent=5 // pred_check
        _
      $region42: #{tpu_custom_call.1} parent=5 // pred_check_branch
        %256 = sbr.rel (%p253) target = $region44
      $region43: #{tpu_custom_call.1} parent=5 // pred_region
        %s257 = ssub.s32 %s19, 1
        %s258 = sand.u32 %s32, 1
        %s259 = scalar_lea.sflag [#allocation3], %s258
        %s260 = sand.u32 %s32, 1
        %s261 = smul.addr %s260, 8
        %s262 = scalar_lea.vmem [#allocation2], %s261
        // Predicated region
        $region45: #{tpu_custom_call.1} parent=43 // pred_check
          %p263 = pneg %p45
        $region46: #{tpu_custom_call.1} parent=43 // pred_check_branch
          %265 = sbr.rel (%p263) target = $region48
        $region47: #{tpu_custom_call.1} parent=43 // pred_region
          %266 = dma.done %s259, 128
        $region48: #{tpu_custom_call.1} parent=43 // pred_fallthru
          _
        // Predicated region
        $region49: #{tpu_custom_call.1} parent=43 // pred_check
          %p267 = pneg %p66
        $region50: #{tpu_custom_call.1} parent=43 // pred_check_branch
          %269 = sbr.rel (%p267) target = $region52
        $region51: #{tpu_custom_call.1} parent=43 // pred_region
          %270 = dma.done [#allocation6], 256
        $region52: #{tpu_custom_call.1} parent=43 // pred_fallthru
          _
        // Predicated region
        $region53: #{tpu_custom_call.1} parent=43 // pred_check
          %p271 = pneg %p108
        $region54: #{tpu_custom_call.1} parent=43 // pred_check_branch
          %273 = sbr.rel (%p271) target = $region56
        $region55: #{tpu_custom_call.1} parent=43 // pred_region
          %274 = dma.done [#allocation6], 256
        $region56: #{tpu_custom_call.1} parent=43 // pred_fallthru
          _
        %s275 = sand.u32 %s32, 1
        %s276 = scalar_lea.sflag [#allocation3], %s275
        %s277 = sand.u32 %s32, 1
        %s278 = smul.addr %s277, 8
        %s279 = scalar_lea.vmem [#allocation2], %s278
        %p280 = pneg %p45
        %p281 = pneg %p42
        %p282 = pneg %p66
        %p283 = pneg %p63
        %p284 = pneg %p87
        %p285 = pneg %p84
        %p286 = pneg %p108
        %p287 = pneg %p105
        %p288 = pneg %p129
        %p289 = pneg %p126
        %p290 = pneg %p150
        %p291 = pneg %p147
        %p292 = pneg %p176
        %p293 = pneg %p173
        %s294 = sand.u32 %s163, 1
        %s295 = scalar_lea.sflag [#allocation4], %s294
        %s296 = sand.u32 %s163, 1
        %s297 = smul.addr %s296, 16
        %s298 = scalar_lea.vmem [#allocation8], %s297
        %v300 = vld [vmem:[%s262] sm:$0xf]
        %v301 = vld [vmem:[%s262 + $0x4] sm:$0xf]
        %v302 = vld [vmem:[#allocation5] sm:$0xf]
        %v303 = vld [vmem:[#allocation5 + $0x4] sm:$0xf]
        %v304 = vld [vmem:[#allocation5 + $0x8] sm:$0xf]
        %v305 = vld [vmem:[#allocation5 + $0xc] sm:$0xf]
        %v306 = vld [vmem:[%s2] sm:$0x1]
        %v308 = vlaneseq
        %v309 = vshrl.u32 %v308, 7
        %v310 = vsub.s32 0, %v309
        %v311 = vrot.slane %v306, %v310
        %v315 = vunpack.c.l.b16 %v300
        %v316 = vunpack.c.l.b16 %v301
        %v317 = vpack.c.b16 %v316, %v315
        %v322 = vunpack.c.l.b16 %v302
        %v323 = vunpack.c.l.b16 %v303
        %v324 = vunpack.c.l.b16 %v304
        %v325 = vunpack.c.l.b16 %v305
        %v326 = vpack.c.b16 %v323, %v322
        %v327 = vpack.c.b16 %v325, %v324
        %vm330 = vcmask 261120
        %v332 = vsel %vm330, %v317, 0
        %334 = vmatprep.subr.bf16.mxu0 0
        %335 = vmatpush1.bf16.msra.mxu0 0
        %336 = vmatprep.subr.bf16.mxu0 0
        %337 = vmatpush1.bf16.msra.mxu0 0
        %338 = vmatprep.subr.bf16.mxu0 0
        %339 = vmatpush1.bf16.msra.mxu0 0
        %340 = vmatprep.subr.bf16.mxu0 0
        %341 = vmatpush1.bf16.msra.mxu0 0
        %342 = vmatprep.subr.bf16.mxu0 0
        %343 = vmatpush1.bf16.msra.mxu0 0
        %344 = vmatprep.subr.bf16.mxu0 0
        %345 = vmatpush1.bf16.msra.mxu0 0
        %346 = vmatprep.subr.bf16.mxu0 0
        %347 = vmatpush1.bf16.msra.mxu0 %v327
        %348 = vmatprep.subr.bf16.mxu0 0
        %349 = vmatpush1.bf16.msra.mxu0 %v326
        %350 = vmatprep.subr.bf16.mxu0 0
        %351 = vmatpush2.bf16.msra.mxu0 0
        %352 = vmatprep.subr.bf16.mxu0 0
        %353 = vmatpush2.bf16.msra.mxu0 0
        %354 = vmatprep.subr.bf16.mxu0 0
        %355 = vmatpush2.bf16.msra.mxu0 0
        %356 = vmatprep.subr.bf16.mxu0 0
        %357 = vmatpush2.bf16.msra.mxu0 0
        %358 = vmatprep.subr.bf16.mxu0 0
        %359 = vmatpush2.bf16.msra.mxu0 0
        %360 = vmatprep.subr.bf16.mxu0 0
        %361 = vmatpush2.bf16.msra.mxu0 0
        %362 = vmatprep.subr.bf16.mxu0 0
        %363 = vmatpush2.bf16.msra.mxu0 0
        %364 = vmatprep.subr.bf16.mxu0 0
        %365 = vmatpush2.bf16.msra.mxu0 0
        %366 = vmatprep.mubr.bf16.mxu0 0
        %367 = vmatmul.mubr.bf16.gmra.mxu0 %v332
        %v368 = vpop.f32.mrf.mxu0
        %v369 = vadd.f32 %v311, %v368
        %v370 = vpop.f32.mrf.mxu0
        %v371 = vpop.f32.mrf.mxu0
        %v372 = vadd.f32 %v311, %v371
        %v373 = vpop.f32.mrf.mxu0
        %374 = vdwg.mxu0
        %v375 = vpack.c.bf16 %v372, %v369
        %v376 = vld [vmem:[%s5] sm:$0x1]
        %v378 = vlaneseq
        %v379 = vshrl.u32 %v378, 7
        %v380 = vsub.s32 0, %v379
        %v381 = vrot.slane %v376, %v380
        %384 = vrot.lane.b32.xlu0 %v375, 96
        %v385 = vpop.permute.xlu0 %384
        %vm386 = vcmask 64512
        %v388 = vsel %vm386, %v375, 0
        %v391 = vsel %vm386, %v385, 0
        %393 = vmatprep.subr.bf16.mxu0 0
        %394 = vmatpush1.bf16.xpose.msra.mxu0 0
        %395 = vmatprep.subr.bf16.mxu0 0
        %396 = vmatpush1.bf16.xpose.msra.mxu0 0
        %397 = vmatprep.subr.bf16.mxu0 0
        %398 = vmatpush1.bf16.xpose.msra.mxu0 0
        %399 = vmatprep.subr.bf16.mxu0 0
        %400 = vmatpush1.bf16.xpose.msra.mxu0 0
        %401 = vmatprep.subr.bf16.mxu0 0
        %402 = vmatpush1.bf16.xpose.msra.mxu0 0
        %403 = vmatprep.subr.bf16.mxu0 0
        %404 = vmatpush1.bf16.xpose.msra.mxu0 0
        %405 = vmatprep.subr.bf16.mxu0 0
        %406 = vmatpush1.bf16.xpose.msra.mxu0 0
        %407 = vmatprep.subr.bf16.mxu0 0
        %408 = vmatpush1.bf16.xpose.msra.mxu0 %v391
        %409 = vmatprep.subr.bf16.mxu0 0
        %410 = vmatpush2.bf16.xpose.msra.mxu0 0
        %411 = vmatprep.subr.bf16.mxu0 0
        %412 = vmatpush2.bf16.xpose.msra.mxu0 0
        %413 = vmatprep.subr.bf16.mxu0 0
        %414 = vmatpush2.bf16.xpose.msra.mxu0 0
        %415 = vmatprep.subr.bf16.mxu0 0
        %416 = vmatpush2.bf16.xpose.msra.mxu0 0
        %417 = vmatprep.subr.bf16.mxu0 0
        %418 = vmatpush2.bf16.xpose.msra.mxu0 0
        %419 = vmatprep.subr.bf16.mxu0 0
        %420 = vmatpush2.bf16.xpose.msra.mxu0 0
        %421 = vmatprep.subr.bf16.mxu0 0
        %422 = vmatpush2.bf16.xpose.msra.mxu0 0
        %423 = vmatprep.subr.bf16.mxu0 0
        %424 = vmatpush2.bf16.xpose.msra.mxu0 0
        %425 = vmatprep.mubr.bf16.mxu0 0
        %426 = vmatmul.mubr.bf16.gmra.mxu0 %v388
        %v427 = vpop.f32.mrf.mxu0
        %v428 = vadd.f32 %v381, %v427
        %v429 = vpop.f32.mrf.mxu0
        %v430 = vpop.f32.mrf.mxu0
        %v431 = vadd.f32 %v381, %v430
        %v432 = vpop.f32.mrf.mxu0
        %433 = vdwg.mxu0
        %vm434 = vcmask 130048
        %v435 = vsel %vm434, %v428, -inf
        %436 = vmax.xlane.f32.xlu0 %v435
        %v437 = vpop.xlane.xlu0 %436
        %v438 = vsel %vm434, %v431, -inf
        %439 = vmax.xlane.f32.xlu0 %v438
        %v440 = vpop.xlane.xlu0 %439
        %v441 = vsub.f32 %v428, %v437
        %v442 = vsub.f32 %v431, %v440
        %v443 = vmul.f32 %v441, 1.442695
        %v444 = vpow.pop %v443
        %v445 = vmul.f32 %v442, 1.442695
        %v446 = vpow.pop %v445
        %v447 = vsel %vm434, %v444, 0.0
        %448 = vadd.xlane.f32.xlu0 %v447
        %v449 = vpop.xlane.xlu0 %448
        %v450 = vsel %vm434, %v446, 0.0
        %451 = vadd.xlane.f32.xlu0 %v450
        %v452 = vpop.xlane.xlu0 %451
        %v453 = vpack.c.bf16 %v446, %v444
        %454 = vrot.lane.b32.xlu0 %v375, 64
        %v455 = vpop.permute.xlu0 %454
        %v458 = vsel %vm434, %v453, 0
        %460 = vmatprep.subr.bf16.mxu0 0
        %461 = vmatpush1.bf16.msra.mxu0 0
        %462 = vmatprep.subr.bf16.mxu0 0
        %463 = vmatpush1.bf16.msra.mxu0 0
        %464 = vmatprep.subr.bf16.mxu0 0
        %465 = vmatpush1.bf16.msra.mxu0 0
        %466 = vmatprep.subr.bf16.mxu0 0
        %467 = vmatpush1.bf16.msra.mxu0 0
        %468 = vmatprep.subr.bf16.mxu0 0
        %469 = vmatpush1.bf16.msra.mxu0 0
        %470 = vmatprep.subr.bf16.mxu0 0
        %471 = vmatpush1.bf16.msra.mxu0 0
        %472 = vmatprep.subr.bf16.mxu0 0
        %473 = vmatpush1.bf16.msra.mxu0 0
        %474 = vmatprep.subr.bf16.mxu0 0
        %475 = vmatpush1.bf16.msra.mxu0 %v455
        %476 = vmatprep.subr.bf16.mxu0 0
        %477 = vmatpush2.bf16.msra.mxu0 0
        %478 = vmatprep.subr.bf16.mxu0 0
        %479 = vmatpush2.bf16.msra.mxu0 0
        %480 = vmatprep.subr.bf16.mxu0 0
        %481 = vmatpush2.bf16.msra.mxu0 0
        %482 = vmatprep.subr.bf16.mxu0 0
        %483 = vmatpush2.bf16.msra.mxu0 0
        %484 = vmatprep.subr.bf16.mxu0 0
        %485 = vmatpush2.bf16.msra.mxu0 0
        %486 = vmatprep.subr.bf16.mxu0 0
        %487 = vmatpush2.bf16.msra.mxu0 0
        %488 = vmatprep.subr.bf16.mxu0 0
        %489 = vmatpush2.bf16.msra.mxu0 0
        %490 = vmatprep.subr.bf16.mxu0 0
        %491 = vmatpush2.bf16.msra.mxu0 0
        %492 = vmatprep.mubr.bf16.mxu0 0
        %493 = vmatmul.mubr.bf16.gmra.mxu0 %v458
        %v494 = vpop.f32.mrf.mxu0
        %v495 = vadd.f32 0.0, %v494
        %v496 = vpop.f32.mrf.mxu0
        %v497 = vpop.f32.mrf.mxu0
        %v498 = vadd.f32 0.0, %v497
        %v499 = vpop.f32.mrf.mxu0
        %500 = vdwg.mxu0
        %v501 = vrcp.pop %v449
        %v502 = vrcp.pop %v452
        %v503 = vmul.f32 %v495, %v501
        %v504 = vmul.f32 %v498, %v502
        %v505 = vpack.c.bf16 %v504, %v503
        %506 = vrot.lane.b32.xlu0 %v375, 120
        %v507 = vpop.permute.xlu0 %506
        %508 = vrot.lane.b32.xlu0 %v375, 88
        %v509 = vpop.permute.xlu0 %508
        %v511 = vsel %vm386, %v507, 0
        %v514 = vsel %vm386, %v509, 0
        %516 = vmatprep.subr.bf16.mxu0 0
        %517 = vmatpush1.bf16.xpose.msra.mxu0 0
        %518 = vmatprep.subr.bf16.mxu0 0
        %519 = vmatpush1.bf16.xpose.msra.mxu0 0
        %520 = vmatprep.subr.bf16.mxu0 0
        %521 = vmatpush1.bf16.xpose.msra.mxu0 0
        %522 = vmatprep.subr.bf16.mxu0 0
        %523 = vmatpush1.bf16.xpose.msra.mxu0 0
        %524 = vmatprep.subr.bf16.mxu0 0
        %525 = vmatpush1.bf16.xpose.msra.mxu0 0
        %526 = vmatprep.subr.bf16.mxu0 0
        %527 = vmatpush1.bf16.xpose.msra.mxu0 0
        %528 = vmatprep.subr.bf16.mxu0 0
        %529 = vmatpush1.bf16.xpose.msra.mxu0 0
        %530 = vmatprep.subr.bf16.mxu0 0
        %531 = vmatpush1.bf16.xpose.msra.mxu0 %v514
        %532 = vmatprep.subr.bf16.mxu0 0
        %533 = vmatpush2.bf16.xpose.msra.mxu0 0
        %534 = vmatprep.subr.bf16.mxu0 0
        %535 = vmatpush2.bf16.xpose.msra.mxu0 0
        %536 = vmatprep.subr.bf16.mxu0 0
        %537 = vmatpush2.bf16.xpose.msra.mxu0 0
        %538 = vmatprep.subr.bf16.mxu0 0
        %539 = vmatpush2.bf16.xpose.msra.mxu0 0
        %540 = vmatprep.subr.bf16.mxu0 0
        %541 = vmatpush2.bf16.xpose.msra.mxu0 0
        %542 = vmatprep.subr.bf16.mxu0 0
        %543 = vmatpush2.bf16.xpose.msra.mxu0 0
        %544 = vmatprep.subr.bf16.mxu0 0
        %545 = vmatpush2.bf16.xpose.msra.mxu0 0
        %546 = vmatprep.subr.bf16.mxu0 0
        %547 = vmatpush2.bf16.xpose.msra.mxu0 0
        %548 = vmatprep.mubr.bf16.mxu0 0
        %549 = vmatmul.mubr.bf16.gmra.mxu0 %v511
        %v550 = vpop.f32.mrf.mxu0
        %v551 = vadd.f32 %v381, %v550
        %v552 = vpop.f32.mrf.mxu0
        %v553 = vpop.f32.mrf.mxu0
        %v554 = vadd.f32 %v381, %v553
        %v555 = vpop.f32.mrf.mxu0
        %556 = vdwg.mxu0
        %v557 = vsel %vm434, %v551, -inf
        %558 = vmax.xlane.f32.xlu0 %v557
        %v559 = vpop.xlane.xlu0 %558
        %v560 = vsel %vm434, %v554, -inf
        %561 = vmax.xlane.f32.xlu0 %v560
        %v562 = vpop.xlane.xlu0 %561
        %v563 = vsub.f32 %v551, %v559
        %v564 = vsub.f32 %v554, %v562
        %v565 = vmul.f32 %v563, 1.442695
        %v566 = vpow.pop %v565
        %v567 = vmul.f32 %v564, 1.442695
        %v568 = vpow.pop %v567
        %v569 = vsel %vm434, %v566, 0.0
        %570 = vadd.xlane.f32.xlu0 %v569
        %v571 = vpop.xlane.xlu0 %570
        %v572 = vsel %vm434, %v568, 0.0
        %573 = vadd.xlane.f32.xlu0 %v572
        %v574 = vpop.xlane.xlu0 %573
        %v575 = vpack.c.bf16 %v568, %v566
        %576 = vrot.lane.b32.xlu0 %v375, 56
        %v577 = vpop.permute.xlu0 %576
        %v580 = vsel %vm434, %v575, 0
        %582 = vmatprep.subr.bf16.mxu0 0
        %583 = vmatpush1.bf16.msra.mxu0 0
        %584 = vmatprep.subr.bf16.mxu0 0
        %585 = vmatpush1.bf16.msra.mxu0 0
        %586 = vmatprep.subr.bf16.mxu0 0
        %587 = vmatpush1.bf16.msra.mxu0 0
        %588 = vmatprep.subr.bf16.mxu0 0
        %589 = vmatpush1.bf16.msra.mxu0 0
        %590 = vmatprep.subr.bf16.mxu0 0
        %591 = vmatpush1.bf16.msra.mxu0 0
        %592 = vmatprep.subr.bf16.mxu0 0
        %593 = vmatpush1.bf16.msra.mxu0 0
        %594 = vmatprep.subr.bf16.mxu0 0
        %595 = vmatpush1.bf16.msra.mxu0 0
        %596 = vmatprep.subr.bf16.mxu0 0
        %597 = vmatpush1.bf16.msra.mxu0 %v577
        %598 = vmatprep.subr.bf16.mxu0 0
        %599 = vmatpush2.bf16.msra.mxu0 0
        %600 = vmatprep.subr.bf16.mxu0 0
        %601 = vmatpush2.bf16.msra.mxu0 0
        %602 = vmatprep.subr.bf16.mxu0 0
        %603 = vmatpush2.bf16.msra.mxu0 0
        %604 = vmatprep.subr.bf16.mxu0 0
        %605 = vmatpush2.bf16.msra.mxu0 0
        %606 = vmatprep.subr.bf16.mxu0 0
        %607 = vmatpush2.bf16.msra.mxu0 0
        %608 = vmatprep.subr.bf16.mxu0 0
        %609 = vmatpush2.bf16.msra.mxu0 0
        %610 = vmatprep.subr.bf16.mxu0 0
        %611 = vmatpush2.bf16.msra.mxu0 0
        %612 = vmatprep.subr.bf16.mxu0 0
        %613 = vmatpush2.bf16.msra.mxu0 0
        %614 = vmatprep.mubr.bf16.mxu0 0
        %615 = vmatmul.mubr.bf16.gmra.mxu0 %v580
        %v616 = vpop.f32.mrf.mxu0
        %v617 = vadd.f32 0.0, %v616
        %v618 = vpop.f32.mrf.mxu0
        %v619 = vpop.f32.mrf.mxu0
        %v620 = vadd.f32 0.0, %v619
        %v621 = vpop.f32.mrf.mxu0
        %622 = vdwg.mxu0
        %v623 = vrcp.pop %v571
        %v624 = vrcp.pop %v574
        %v625 = vmul.f32 %v617, %v623
        %v626 = vmul.f32 %v620, %v624
        %v627 = vpack.c.bf16 %v626, %v625
        %628 = vrot.lane.b32.xlu0 %v375, 112
        %v629 = vpop.permute.xlu0 %628
        %630 = vrot.lane.b32.xlu0 %v375, 80
        %v631 = vpop.permute.xlu0 %630
        %v633 = vsel %vm386, %v629, 0
        %v636 = vsel %vm386, %v631, 0
        %638 = vmatprep.subr.bf16.mxu0 0
        %639 = vmatpush1.bf16.xpose.msra.mxu0 0
        %640 = vmatprep.subr.bf16.mxu0 0
        %641 = vmatpush1.bf16.xpose.msra.mxu0 0
        %642 = vmatprep.subr.bf16.mxu0 0
        %643 = vmatpush1.bf16.xpose.msra.mxu0 0
        %644 = vmatprep.subr.bf16.mxu0 0
        %645 = vmatpush1.bf16.xpose.msra.mxu0 0
        %646 = vmatprep.subr.bf16.mxu0 0
        %647 = vmatpush1.bf16.xpose.msra.mxu0 0
        %648 = vmatprep.subr.bf16.mxu0 0
        %649 = vmatpush1.bf16.xpose.msra.mxu0 0
        %650 = vmatprep.subr.bf16.mxu0 0
        %651 = vmatpush1.bf16.xpose.msra.mxu0 0
        %652 = vmatprep.subr.bf16.mxu0 0
        %653 = vmatpush1.bf16.xpose.msra.mxu0 %v636
        %654 = vmatprep.subr.bf16.mxu0 0
        %655 = vmatpush2.bf16.xpose.msra.mxu0 0
        %656 = vmatprep.subr.bf16.mxu0 0
        %657 = vmatpush2.bf16.xpose.msra.mxu0 0
        %658 = vmatprep.subr.bf16.mxu0 0
        %659 = vmatpush2.bf16.xpose.msra.mxu0 0
        %660 = vmatprep.subr.bf16.mxu0 0
        %661 = vmatpush2.bf16.xpose.msra.mxu0 0
        %662 = vmatprep.subr.bf16.mxu0 0
        %663 = vmatpush2.bf16.xpose.msra.mxu0 0
        %664 = vmatprep.subr.bf16.mxu0 0
        %665 = vmatpush2.bf16.xpose.msra.mxu0 0
        %666 = vmatprep.subr.bf16.mxu0 0
        %667 = vmatpush2.bf16.xpose.msra.mxu0 0
        %668 = vmatprep.subr.bf16.mxu0 0
        %669 = vmatpush2.bf16.xpose.msra.mxu0 0
        %670 = vmatprep.mubr.bf16.mxu0 0
        %671 = vmatmul.mubr.bf16.gmra.mxu0 %v633
        %v672 = vpop.f32.mrf.mxu0
        %v673 = vadd.f32 %v381, %v672
        %v674 = vpop.f32.mrf.mxu0
        %v675 = vpop.f32.mrf.mxu0
        %v676 = vadd.f32 %v381, %v675
        %v677 = vpop.f32.mrf.mxu0
        %678 = vdwg.mxu0
        %v679 = vsel %vm434, %v673, -inf
        %680 = vmax.xlane.f32.xlu0 %v679
        %v681 = vpop.xlane.xlu0 %680
        %v682 = vsel %vm434, %v676, -inf
        %683 = vmax.xlane.f32.xlu0 %v682
        %v684 = vpop.xlane.xlu0 %683
        %v685 = vsub.f32 %v673, %v681
        %v686 = vsub.f32 %v676, %v684
        %v687 = vmul.f32 %v685, 1.442695
        %v688 = vpow.pop %v687
        %v689 = vmul.f32 %v686, 1.442695
        %v690 = vpow.pop %v689
        %v691 = vsel %vm434, %v688, 0.0
        %692 = vadd.xlane.f32.xlu0 %v691
        %v693 = vpop.xlane.xlu0 %692
        %v694 = vsel %vm434, %v690, 0.0
        %695 = vadd.xlane.f32.xlu0 %v694
        %v696 = vpop.xlane.xlu0 %695
        %v697 = vpack.c.bf16 %v690, %v688
        %698 = vrot.lane.b32.xlu0 %v375, 48
        %v699 = vpop.permute.xlu0 %698
        %v702 = vsel %vm434, %v697, 0
        %704 = vmatprep.subr.bf16.mxu0 0
        %705 = vmatpush1.bf16.msra.mxu0 0
        %706 = vmatprep.subr.bf16.mxu0 0
        %707 = vmatpush1.bf16.msra.mxu0 0
        %708 = vmatprep.subr.bf16.mxu0 0
        %709 = vmatpush1.bf16.msra.mxu0 0
        %710 = vmatprep.subr.bf16.mxu0 0
        %711 = vmatpush1.bf16.msra.mxu0 0
        %712 = vmatprep.subr.bf16.mxu0 0
        %713 = vmatpush1.bf16.msra.mxu0 0
        %714 = vmatprep.subr.bf16.mxu0 0
        %715 = vmatpush1.bf16.msra.mxu0 0
        %716 = vmatprep.subr.bf16.mxu0 0
        %717 = vmatpush1.bf16.msra.mxu0 0
        %718 = vmatprep.subr.bf16.mxu0 0
        %719 = vmatpush1.bf16.msra.mxu0 %v699
        %720 = vmatprep.subr.bf16.mxu0 0
        %721 = vmatpush2.bf16.msra.mxu0 0
        %722 = vmatprep.subr.bf16.mxu0 0
        %723 = vmatpush2.bf16.msra.mxu0 0
        %724 = vmatprep.subr.bf16.mxu0 0
        %725 = vmatpush2.bf16.msra.mxu0 0
        %726 = vmatprep.subr.bf16.mxu0 0
        %727 = vmatpush2.bf16.msra.mxu0 0
        %728 = vmatprep.subr.bf16.mxu0 0
        %729 = vmatpush2.bf16.msra.mxu0 0
        %730 = vmatprep.subr.bf16.mxu0 0
        %731 = vmatpush2.bf16.msra.mxu0 0
        %732 = vmatprep.subr.bf16.mxu0 0
        %733 = vmatpush2.bf16.msra.mxu0 0
        %734 = vmatprep.subr.bf16.mxu0 0
        %735 = vmatpush2.bf16.msra.mxu0 0
        %736 = vmatprep.mubr.bf16.mxu0 0
        %737 = vmatmul.mubr.bf16.gmra.mxu0 %v702
        %v738 = vpop.f32.mrf.mxu0
        %v739 = vadd.f32 0.0, %v738
        %v740 = vpop.f32.mrf.mxu0
        %v741 = vpop.f32.mrf.mxu0
        %v742 = vadd.f32 0.0, %v741
        %v743 = vpop.f32.mrf.mxu0
        %744 = vdwg.mxu0
        %v745 = vrcp.pop %v693
        %v746 = vrcp.pop %v696
        %v747 = vmul.f32 %v739, %v745
        %v748 = vmul.f32 %v742, %v746
        %v749 = vpack.c.bf16 %v748, %v747
        %750 = vrot.lane.b32.xlu0 %v375, 104
        %v751 = vpop.permute.xlu0 %750
        %752 = vrot.lane.b32.xlu0 %v375, 72
        %v753 = vpop.permute.xlu0 %752
        %v755 = vsel %vm386, %v751, 0
        %v758 = vsel %vm386, %v753, 0
        %760 = vmatprep.subr.bf16.mxu0 0
        %761 = vmatpush1.bf16.xpose.msra.mxu0 0
        %762 = vmatprep.subr.bf16.mxu0 0
        %763 = vmatpush1.bf16.xpose.msra.mxu0 0
        %764 = vmatprep.subr.bf16.mxu0 0
        %765 = vmatpush1.bf16.xpose.msra.mxu0 0
        %766 = vmatprep.subr.bf16.mxu0 0
        %767 = vmatpush1.bf16.xpose.msra.mxu0 0
        %768 = vmatprep.subr.bf16.mxu0 0
        %769 = vmatpush1.bf16.xpose.msra.mxu0 0
        %770 = vmatprep.subr.bf16.mxu0 0
        %771 = vmatpush1.bf16.xpose.msra.mxu0 0
        %772 = vmatprep.subr.bf16.mxu0 0
        %773 = vmatpush1.bf16.xpose.msra.mxu0 0
        %774 = vmatprep.subr.bf16.mxu0 0
        %775 = vmatpush1.bf16.xpose.msra.mxu0 %v758
        %776 = vmatprep.subr.bf16.mxu0 0
        %777 = vmatpush2.bf16.xpose.msra.mxu0 0
        %778 = vmatprep.subr.bf16.mxu0 0
        %779 = vmatpush2.bf16.xpose.msra.mxu0 0
        %780 = vmatprep.subr.bf16.mxu0 0
        %781 = vmatpush2.bf16.xpose.msra.mxu0 0
        %782 = vmatprep.subr.bf16.mxu0 0
        %783 = vmatpush2.bf16.xpose.msra.mxu0 0
        %784 = vmatprep.subr.bf16.mxu0 0
        %785 = vmatpush2.bf16.xpose.msra.mxu0 0
        %786 = vmatprep.subr.bf16.mxu0 0
        %787 = vmatpush2.bf16.xpose.msra.mxu0 0
        %788 = vmatprep.subr.bf16.mxu0 0
        %789 = vmatpush2.bf16.xpose.msra.mxu0 0
        %790 = vmatprep.subr.bf16.mxu0 0
        %791 = vmatpush2.bf16.xpose.msra.mxu0 0
        %792 = vmatprep.mubr.bf16.mxu0 0
        %793 = vmatmul.mubr.bf16.gmra.mxu0 %v755
        %v794 = vpop.f32.mrf.mxu0
        %v795 = vadd.f32 %v381, %v794
        %v796 = vpop.f32.mrf.mxu0
        %v797 = vpop.f32.mrf.mxu0
        %v798 = vadd.f32 %v381, %v797
        %v799 = vpop.f32.mrf.mxu0
        %800 = vdwg.mxu0
        %v801 = vsel %vm434, %v795, -inf
        %802 = vmax.xlane.f32.xlu0 %v801
        %v803 = vpop.xlane.xlu0 %802
        %v804 = vsel %vm434, %v798, -inf
        %805 = vmax.xlane.f32.xlu0 %v804
        %v806 = vpop.xlane.xlu0 %805
        %v807 = vsub.f32 %v795, %v803
        %v808 = vsub.f32 %v798, %v806
        %v809 = vmul.f32 %v807, 1.442695
        %v810 = vpow.pop %v809
        %v811 = vmul.f32 %v808, 1.442695
        %v812 = vpow.pop %v811
        %v813 = vsel %vm434, %v810, 0.0
        %814 = vadd.xlane.f32.xlu0 %v813
        %v815 = vpop.xlane.xlu0 %814
        %v816 = vsel %vm434, %v812, 0.0
        %817 = vadd.xlane.f32.xlu0 %v816
        %v818 = vpop.xlane.xlu0 %817
        %v819 = vpack.c.bf16 %v812, %v810
        %820 = vrot.lane.b32.xlu0 %v375, 40
        %v821 = vpop.permute.xlu0 %820
        %v824 = vsel %vm434, %v819, 0
        %826 = vmatprep.subr.bf16.mxu0 0
        %827 = vmatpush1.bf16.msra.mxu0 0
        %828 = vmatprep.subr.bf16.mxu0 0
        %829 = vmatpush1.bf16.msra.mxu0 0
        %830 = vmatprep.subr.bf16.mxu0 0
        %831 = vmatpush1.bf16.msra.mxu0 0
        %832 = vmatprep.subr.bf16.mxu0 0
        %833 = vmatpush1.bf16.msra.mxu0 0
        %834 = vmatprep.subr.bf16.mxu0 0
        %835 = vmatpush1.bf16.msra.mxu0 0
        %836 = vmatprep.subr.bf16.mxu0 0
        %837 = vmatpush1.bf16.msra.mxu0 0
        %838 = vmatprep.subr.bf16.mxu0 0
        %839 = vmatpush1.bf16.msra.mxu0 0
        %840 = vmatprep.subr.bf16.mxu0 0
        %841 = vmatpush1.bf16.msra.mxu0 %v821
        %842 = vmatprep.subr.bf16.mxu0 0
        %843 = vmatpush2.bf16.msra.mxu0 0
        %844 = vmatprep.subr.bf16.mxu0 0
        %845 = vmatpush2.bf16.msra.mxu0 0
        %846 = vmatprep.subr.bf16.mxu0 0
        %847 = vmatpush2.bf16.msra.mxu0 0
        %848 = vmatprep.subr.bf16.mxu0 0
        %849 = vmatpush2.bf16.msra.mxu0 0
        %850 = vmatprep.subr.bf16.mxu0 0
        %851 = vmatpush2.bf16.msra.mxu0 0
        %852 = vmatprep.subr.bf16.mxu0 0
        %853 = vmatpush2.bf16.msra.mxu0 0
        %854 = vmatprep.subr.bf16.mxu0 0
        %855 = vmatpush2.bf16.msra.mxu0 0
        %856 = vmatprep.subr.bf16.mxu0 0
        %857 = vmatpush2.bf16.msra.mxu0 0
        %858 = vmatprep.mubr.bf16.mxu0 0
        %859 = vmatmul.mubr.bf16.gmra.mxu0 %v824
        %v860 = vpop.f32.mrf.mxu0
        %v861 = vadd.f32 0.0, %v860
        %v862 = vpop.f32.mrf.mxu0
        %v863 = vpop.f32.mrf.mxu0
        %v864 = vadd.f32 0.0, %v863
        %v865 = vpop.f32.mrf.mxu0
        %866 = vdwg.mxu0
        %v867 = vrcp.pop %v815
        %v868 = vrcp.pop %v818
        %v869 = vmul.f32 %v861, %v867
        %v870 = vmul.f32 %v864, %v868
        %v871 = vpack.c.bf16 %v870, %v869
        %873 = vrot.lane.b32.xlu0 %v627, 8
        %v874 = vpop.permute.xlu0 %873
        %876 = vrot.lane.b32.xlu0 %v749, 16
        %v877 = vpop.permute.xlu0 %876
        %879 = vrot.lane.b32.xlu0 %v871, 24
        %v880 = vpop.permute.xlu0 %879
        %v883 = vsel %vm386, %v505, %v874
        %v885 = vsel %vm434, %v883, %v877
        %vm886 = vcmask 195584
        %v888 = vsel %vm886, %v885, %v880
        %v889 = vld [vmem:[#allocation7] sm:$0xf]
        %v890 = vld [vmem:[#allocation7 + $0x4] sm:$0xf]
        %v891 = vld [vmem:[#allocation7 + $0x8] sm:$0xf]
        %v892 = vld [vmem:[#allocation7 + $0xc] sm:$0xf]
        %v893 = vld [vmem:[%s4] sm:$0x1]
        %v895 = vlaneseq
        %v896 = vshrl.u32 %v895, 7
        %v897 = vsub.s32 0, %v896
        %v898 = vrot.slane %v893, %v897
        %v904 = vunpack.c.l.b16 %v889
        %v905 = vunpack.c.l.b16 %v890
        %v906 = vunpack.c.l.b16 %v891
        %v907 = vunpack.c.l.b16 %v892
        %v908 = vpack.c.b16 %v905, %v904
        %v909 = vpack.c.b16 %v907, %v906
        %v912 = vsel %vm330, %v888, 0
        %914 = vmatprep.subr.bf16.mxu0 0
        %915 = vmatpush1.bf16.msra.mxu0 0
        %916 = vmatprep.subr.bf16.mxu0 0
        %917 = vmatpush1.bf16.msra.mxu0 0
        %918 = vmatprep.subr.bf16.mxu0 0
        %919 = vmatpush1.bf16.msra.mxu0 0
        %920 = vmatprep.subr.bf16.mxu0 0
        %921 = vmatpush1.bf16.msra.mxu0 0
        %922 = vmatprep.subr.bf16.mxu0 0
        %923 = vmatpush1.bf16.msra.mxu0 0
        %924 = vmatprep.subr.bf16.mxu0 0
        %925 = vmatpush1.bf16.msra.mxu0 0
        %926 = vmatprep.subr.bf16.mxu0 0
        %927 = vmatpush1.bf16.msra.mxu0 %v909
        %928 = vmatprep.subr.bf16.mxu0 0
        %929 = vmatpush1.bf16.msra.mxu0 %v908
        %930 = vmatprep.subr.bf16.mxu0 0
        %931 = vmatpush2.bf16.msra.mxu0 0
        %932 = vmatprep.subr.bf16.mxu0 0
        %933 = vmatpush2.bf16.msra.mxu0 0
        %934 = vmatprep.subr.bf16.mxu0 0
        %935 = vmatpush2.bf16.msra.mxu0 0
        %936 = vmatprep.subr.bf16.mxu0 0
        %937 = vmatpush2.bf16.msra.mxu0 0
        %938 = vmatprep.subr.bf16.mxu0 0
        %939 = vmatpush2.bf16.msra.mxu0 0
        %940 = vmatprep.subr.bf16.mxu0 0
        %941 = vmatpush2.bf16.msra.mxu0 0
        %942 = vmatprep.subr.bf16.mxu0 0
        %943 = vmatpush2.bf16.msra.mxu0 0
        %944 = vmatprep.subr.bf16.mxu0 0
        %945 = vmatpush2.bf16.msra.mxu0 0
        %946 = vmatprep.mubr.bf16.mxu0 0
        %947 = vmatmul.mubr.bf16.gmra.mxu0 %v912
        %v948 = vpop.f32.mrf.mxu0
        %v949 = vadd.f32 %v898, %v948
        %v950 = vpop.f32.mrf.mxu0
        %v951 = vpop.f32.mrf.mxu0
        %v952 = vadd.f32 %v898, %v951
        %v953 = vpop.f32.mrf.mxu0
        %954 = vdwg.mxu0
        %955 = vst.msk [vmem:[%s298] sm:$0xff] %vm330, %v949
        %956 = vst.msk [vmem:[%s298 + $0x8] sm:$0xff] %vm330, %v952
        %s957 = sand.u32 %s163, 1
        %s958 = scalar_lea.sflag [#allocation4], %s957
        %s959 = sand.u32 %s163, 1
        %s960 = smul.addr %s959, 16
        %s961 = scalar_lea.vmem [#allocation8], %s960
        // Predicated region
        $region57: #{tpu_custom_call.1} parent=43 // pred_check
          %p962 = pneg %p173
        $region58: #{tpu_custom_call.1} parent=43 // pred_check_branch
          %964 = sbr.rel (%p962) target = $region60
        $region59: #{tpu_custom_call.1} parent=43 // pred_region
          %s966 = ssub.s32 256, 256
          %967 = vsyncadd %s958, %s966
          %s968 = smul.addr %s24, 2
          %s969 = smul.addr %s968, 128
          %s970 = scalar_lea.hbm %s6, %s969
          %s971 = sshll.u32 %s961, 4
          %s972 = int_to_ptr.vmem [resolvable:$true] %s971
          %977 = dma.vmem_to_hbm [thread:$0]  %s972, 256, %s970, %s958, 128, 128, 8
        $region60: #{tpu_custom_call.1} parent=43 // pred_fallthru
          _
      $region44: #{tpu_custom_call.1} parent=5 // pred_fallthru
        _
      %p978 = scmp.le.s32.totalorder 2, %s19
      // Predicated region
      $region61: #{tpu_custom_call.1} parent=5 // pred_check
        %p979 = pneg %p978
      $region62: #{tpu_custom_call.1} parent=5 // pred_check_branch
        %981 = sbr.rel (%p979) target = $region64
      $region63: #{tpu_custom_call.1} parent=5 // pred_region
        %s982 = ssub.s32 %s19, 2
        // Predicated region
        $region65: #{tpu_custom_call.1} parent=63 // pred_check
          %p983 = pneg %p179
        $region66: #{tpu_custom_call.1} parent=63 // pred_check_branch
          %985 = sbr.rel (%p983) target = $region68
        $region67: #{tpu_custom_call.1} parent=63 // pred_region
          %s986 = sand.u32 %s164, 1
          %s987 = scalar_lea.sflag [#allocation4], %s986
          %s988 = sand.u32 %s164, 1
          %s989 = smul.addr %s988, 16
          %s990 = scalar_lea.vmem [#allocation8], %s989
          %991 = dma.done %s987, 256
        $region68: #{tpu_custom_call.1} parent=63 // pred_fallthru
          _
      $region64: #{tpu_custom_call.1} parent=5 // pred_fallthru
        _
    $region6: #{tpu_custom_call.1} parent=1 // loop_footer
      %s23 = sadd.s32 1, %s19
    $region7: #{tpu_custom_call.1} parent=1 // loop_footer_branch
      %18 = sbr.rel target = $region3
    $region8: #{tpu_custom_call.1} parent=1 // loop_exit
      _
    %992 = vsyncpa [#allocation3], 1
    %s993 = scalar_lea.sflag [#allocation3], 1
    %994 = vsyncpa %s993, 1
    %995 = vsyncpa [#allocation6], 1
    %996 = vsyncpa [#allocation4], 1
    %s997 = scalar_lea.sflag [#allocation4], 1
    %998 = vsyncpa %s997, 1

</llo_original>
